<compile_context>
chip_gen: v7x
topology: tpu7x:2x2x1
jax: 0.10.0
libtpu: 0.0.40
codegen_flags: <defaults>
</compile_context>

<pallas_src>
import numpy as np
import jax
import jax.numpy as jnp
from jax import lax
from jax.experimental import pallas as pl
from jax.experimental.pallas import tpu as pltpu


# ----------------------------------------------------------------------------
# Fused PSP kernel (one grid step per batch element)
# ----------------------------------------------------------------------------
def _build_psp_kernel(bins, Cin, Cout, H, W, roll_is_jnp):
    HW = H * W

    def kernel(*refs):
        i = 0
        x_ref = refs[i]; i += 1
        stage_refs = []
        for b in bins:
            if b == 1:                                  # no pooling matrix / no upsample matrix
                stage_refs.append((b, None, refs[i], refs[i + 1], refs[i + 2], None)); i += 3
            else:                                       # (P, wT, scale, shift, Mt)
                stage_refs.append((b, refs[i], refs[i + 1], refs[i + 2],
                                   refs[i + 3], refs[i + 4])); i += 5
        kb_ref, mask_ref, bsc_ref, bsh_ref, out_ref = refs[i:i + 5]

        x_bf = x_ref[0]                                 # (Cin, HW) bf16
        x_f32 = x_bf.astype(jnp.float32)

        # ---- pyramid stages: pool (GEMM) -> 1x1 conv (GEMM) -> BN -> ReLU -> upsample (GEMM)
        pieces = [x_f32]
        for (b, p_ref, w_ref, sc_ref, sh_ref, m_ref) in stage_refs:
            if b == 1:
                pooled = jnp.mean(x_f32, axis=1, keepdims=True)                # (Cin, 1)
            else:
                pooled = jnp.dot(x_bf, p_ref[...],
                                 preferred_element_type=jnp.float32)          # (Cin, b*b)
            y = jnp.dot(w_ref[...], pooled.astype(jnp.bfloat16),
                        preferred_element_type=jnp.float32)                   # (Cout, b*b)
            y = jnp.maximum(y * sc_ref[...] + sh_ref[...], 0.0)               # BN + ReLU (f32)
            if b == 1:
                up = jnp.broadcast_to(y, (Cout, HW))                          # bilinear of 1x1 = const
            else:
                up = jnp.dot(y.astype(jnp.bfloat16), m_ref[...],
                             preferred_element_type=jnp.float32)              # (Cout, HW)
            pieces.append(up)

        cat = jnp.concatenate(pieces, axis=0)                                 # (C_tot, HW) f32

        # ---- 3x3 bottleneck conv (padding=1) as 9 lane-rotated GEMMs + border masks
        masks = mask_ref[...]                                                 # (9, HW) f32
        acc = jnp.zeros((Cout, HW), jnp.float32)
        for k in range(9):
            di, dj = k // 3, k % 3
            s = (di - 1) * W + (dj - 1)                  # flat spatial shift of this tap
            if s == 0:
                rolled = cat
            else:
                amt = (-s) % HW if roll_is_jnp else s % HW
                rolled = pltpu.roll(cat, shift=amt, axis=1)                   # XLU rotation
            t = jnp.dot(kb_ref[k], rolled.astype(jnp.bfloat16),
                        preferred_element_type=jnp.float32)                   # (Cout, HW)
            if di == 1 and dj == 1:
                acc = acc + t
            else:
                acc = acc + masks[k:k + 1, :] * t        # zero out wrapped / out-of-image taps
        out = jnp.maximum(acc * bsc_ref[...] + bsh_ref[...], 0.0)             # BN + ReLU (f32)
        # Dropout2d(0.1) is identity in eval mode.
        out_ref[0] = out                                                      # lane-dense store

    return kernel


def _roll_matches_jnp():
    """One-time guard: pin pltpu.roll's rotation direction against jnp.roll.

    The bottleneck maps every 3x3 tap to a static lane rotation of the channel-major
    activation slab; this tiny probe keeps the tap->shift sign correct across jax versions.
    """
    def probe(x_ref, o_ref):
        o_ref[...] = pltpu.roll(x_ref[...], shift=3, axis=1)

    x = lax.broadcasted_iota(jnp.float32, (8, 256), 1)
    y = pl.pallas_call(probe, out_shape=jax.ShapeDtypeStruct((8, 256), jnp.float32))(x)
    return bool(jnp.all(y == jnp.roll(x, 3, axis=1)))


# ----------------------------------------------------------------------------
# Pallas wrapper
# ----------------------------------------------------------------------------
def psp_forward(x_nchw, params, roll_is_jnp=True):
    N, Cin, H, W = x_nchw.shape
    HW = H * W
    Cout, C_tot = params["Cout"], params["C_tot"]
    bins = tuple(st["bin"] for st in params["stages"])

    x_flat = x_nchw.reshape(N, Cin, HW).astype(jnp.bfloat16)      # NCHW -> (N, C, H*W), bf16

    def const_spec(shape):                                        # fetched once, reused per step
        return pl.BlockSpec(shape, lambda n: (0,) * len(shape))

    inputs = [x_flat]
    in_specs = [pl.BlockSpec((1, Cin, HW), lambda n: (n, 0, 0))]
    for st in params["stages"]:
        b = st["bin"]
        if b > 1:
            inputs.append(st["P"].astype(jnp.bfloat16));  in_specs.append(const_spec((HW, b * b)))
        inputs.append(st["wT"].astype(jnp.bfloat16));     in_specs.append(const_spec((Cout, Cin)))
        inputs.append(st["scale"]);                       in_specs.append(const_spec((Cout, 1)))
        inputs.append(st["shift"]);                       in_specs.append(const_spec((Cout, 1)))
        if b > 1:
            inputs.append(st["Mt"].astype(jnp.bfloat16)); in_specs.append(const_spec((b * b, HW)))
    inputs += [params["kb"].astype(jnp.bfloat16), params["masks"],
               params["bscale"], params["bshift"]]
    in_specs += [const_spec((9, Cout, C_tot)), const_spec((9, HW)),
                 const_spec((Cout, 1)), const_spec((Cout, 1))]

    kernel = _build_psp_kernel(bins, Cin, Cout, H, W, roll_is_jnp)

    out = pl.pallas_call(
        kernel,
        out_shape=jax.ShapeDtypeStruct((N, Cout, HW), jnp.float32),
        grid=(N,),
        in_specs=in_specs,
        out_specs=pl.BlockSpec((1, Cout, HW), lambda n: (n, 0, 0)),
        compiler_params=pltpu.CompilerParams(dimension_semantics=("parallel",)),
    )(*inputs)
    return out.reshape(N, Cout, H, W)                             # NCHW, like the PyTorch module


# ----------------------------------------------------------------------------
# Parameter / matrix construction (host side, numpy)
# ----------------------------------------------------------------------------
def bilinear_matrix(out_size, in_size):
    # 1-D F.interpolate(mode='bilinear', align_corners=True) weights.
    if in_size == 1:
        return np.ones((out_size, 1), np.float32)
    m = np.zeros((out_size, in_size), np.float32)
    for i in range(out_size):
        src = i * (in_size - 1) / (out_size - 1)
        i0 = int(np.floor(src)); i1 = min(i0 + 1, in_size - 1); f = src - i0
        m[i, i0] += 1.0 - f
        m[i, i1] += f
    return m


def pool_matrix(H, W, b):
    # Exact AdaptiveAvgPool2d(b) as an (H*W, b*b) averaging matrix (H, W divisible by b).
    ph, pw = H // b, W // b
    P = np.zeros((H * W, b * b), np.float32)
    for h in range(H):
        for w in range(W):
            P[h * W + w, (h // ph) * b + (w // pw)] = 1.0 / (ph * pw)
    return P


def conv_masks(H, W):
    # mask[k, h*W+w] = 1 if the tap (di,dj)=(k//3,k%3) lands inside the (zero-padded) image.
    m = np.zeros((9, H * W), np.float32)
    hh = np.arange(H)[:, None]
    ww = np.arange(W)[None, :]
    for k in range(9):
        di, dj = k // 3, k % 3
        valid = ((hh + di - 1 >= 0) & (hh + di - 1 < H) &
                 (ww + dj - 1 >= 0) & (ww + dj - 1 < W))
        m[k] = valid.astype(np.float32).reshape(-1)
    return jnp.asarray(m)


def fold_bn(gamma, beta, mean, var, eps=1e-5):
    scale = gamma / jnp.sqrt(var + eps)
    shift = beta - mean * scale
    return scale.reshape(-1, 1), shift.reshape(-1, 1)


def _q(a):
    # Round to the bf16 grid (kept in f32) so the kernel's bf16 casts are lossless.
    return jnp.asarray(a, jnp.float32).astype(jnp.bfloat16).astype(jnp.float32)


def make_params(key, in_channels, bin_sizes, H, W):
    out_channels = in_channels // len(bin_sizes)
    HW = H * W
    keys = jax.random.split(key, len(bin_sizes) + 1)
    stages = []
    for i, b in enumerate(bin_sizes):
        wT = _q(jax.random.normal(keys[i], (out_channels, in_channels), jnp.float32) * 0.1)
        c = jnp.arange(out_channels, dtype=jnp.float32)
        scale, shift = fold_bn(1.0 + 0.05 * c, 0.02 * c, 0.01 * c, 1.0 + 0.03 * c)
        A = _q(bilinear_matrix(H, b))                                  # (H, b)
        B = _q(bilinear_matrix(W, b))                                  # (W, b)
        Mt = _q((A[:, None, :, None] * B[None, :, None, :]).reshape(HW, b * b).T)  # (b*b, HW)
        P = _q(pool_matrix(H, W, b))                                   # (HW, b*b)
        stages.append(dict(bin=b, wT=wT, scale=scale, shift=shift, A=A, B=B, Mt=Mt, P=P))
    C_tot = in_channels + out_channels * len(bin_sizes)
    bw = _q(jax.random.normal(keys[-1], (3, 3, C_tot, out_channels), jnp.float32) * 0.1)  # HWIO
    kb = jnp.transpose(bw, (0, 1, 3, 2)).reshape(9, out_channels, C_tot)  # kb[di*3+dj][co, ci]
    c = jnp.arange(out_channels, dtype=jnp.float32)
    bscale, bshift = fold_bn(1.0 + 0.04 * c, 0.03 * c, 0.02 * c, 1.0 + 0.05 * c)
    return dict(stages=stages, bw_hwio=bw, kb=kb, bscale=bscale, bshift=bshift,
                masks=conv_masks(H, W), Cout=out_channels, C_tot=C_tot)


# ----------------------------------------------------------------------------
# Pure-JAX reference (lax conv) for validation
# ----------------------------------------------------------------------------
def adaptive_avg_pool_nhwc(x, b):
    N, H, W, C = x.shape
    return x.reshape(N, b, H // b, b, W // b, C).mean(axis=(2, 4))


def psp_reference(x_nchw, params):
    N, Cin, H, W = x_nchw.shape
    x = jnp.transpose(x_nchw, (0, 2, 3, 1))                        # NHWC
    pyramids = [x]
    for st in params["stages"]:
        b = st["bin"]
        pooled = adaptive_avg_pool_nhwc(x, b)                      # (N, b, b, Cin)
        y = jnp.einsum("npqi,oi->npqo", pooled, st["wT"])
        y = jnp.maximum(y * st["scale"].reshape(1, 1, 1, -1)
                        + st["shift"].reshape(1, 1, 1, -1), 0.0)
        up = jnp.einsum("hp,wq,npqo->nhwo", st["A"], st["B"], y)
        pyramids.append(up)
    cat = jnp.concatenate(pyramids, axis=-1)
    y = lax.conv_general_dilated(cat, params["bw_hwio"], (1, 1), "SAME",
                                 dimension_numbers=("NHWC", "HWIO", "NHWC"))
    y = jnp.maximum(y * params["bscale"].reshape(1, 1, 1, -1)
                    + params["bshift"].reshape(1, 1, 1, -1), 0.0)
    return jnp.transpose(y, (0, 3, 1, 2))                          # back to NCHW


if __name__ == "__main__":
    N, in_channels, H, W = 2, 16, 16, 16
    bin_sizes = (1, 2, 4, 8)                 # all divide H, W -> exact adaptive-pool match

    key = jax.random.PRNGKey(0)
    kx, kp = jax.random.split(key)
    x = jax.random.normal(kx, (N, in_channels, H, W), jnp.float32)  # PyTorch NCHW layout
    x = x.astype(jnp.bfloat16).astype(jnp.float32)                  # bf16-representable input

    params = make_params(kp, in_channels, bin_sizes, H, W)

    roll_is_jnp = _roll_matches_jnp()
    out = jax.block_until_ready(psp_forward(x, params, roll_is_jnp))
    ref = jax.block_until_ready(psp_reference(x, params))

    np.testing.assert_allclose(np.asarray(out), np.asarray(ref), rtol=3e-2, atol=3e-2)
    assert out.shape == (N, in_channels // len(bin_sizes), H, W)
    print("KERNEL_OK")
</pallas_src>

<mosaic_0001>
module attributes {stable_mosaic.version = 11 : i64} {
  func.func @probe(%arg0: memref<8x256xf32, #tpu.memory_space<vmem>>, %arg1: memref<8x256xf32, #tpu.memory_space<vmem>>) attributes {dimension_semantics = [], scalar_prefetch = 0 : i64, scratch_operands = 0 : i64, tpu.core_type = #tpu.core_type<tc>} {
    %c0 = arith.constant 0 : index
    %c0_0 = arith.constant 0 : index
    %0 = vector.load %arg0[%c0, %c0_0] : memref<8x256xf32, #tpu.memory_space<vmem>>, vector<8x256xf32>
    %c3_i32 = arith.constant 3 : i32
    %1 = tpu.dynamic_rotate %0 by %c3_i32 dim 1 : vector<8x256xf32>, i32 -> vector<8x256xf32>
    %c0_1 = arith.constant 0 : index
    %c0_2 = arith.constant 0 : index
    %2 = vector.load %arg1[%c0_1, %c0_2] : memref<8x256xf32, #tpu.memory_space<vmem>>, vector<8x256xf32>
    tpu.vector_store %arg1[%c0_1, %c0_2], %1 {strides = array<i32>} : memref<8x256xf32, #tpu.memory_space<vmem>>, vector<8x256xf32>,
    return
  }
}

</mosaic_0001>

<llo_original>
// kernel: tpu_custom_call.1
$region0: #{tpu_custom_call.1}
  #allocation0 [shape = 'u32[]', space=smem, size = 0x4, offset = 0x4, fixed_abs, tag = 'smem constant byte address 0x4 - core index']
  #allocation1 [shape = 'u32[144,128]{1,0:T(1,128)}', space=vmem, size = 0x12000, scoped, tag = 'internal scratch']
  %s0 = inlined_call_operand.hbm [shape: f32[8,256], index: 0, kind: input, shape index: {}]
  %s1 = inlined_call_operand.hbm [shape: f32[8,256], index: 1, kind: output, shape index: {}]
  %s2 = sld [smem:[#allocation0]]
  $region18: #{tpu_custom_call.1} parent=0
    _
  %s4 = ssub.s32 1, %s2
  %s5 = scalar_select 0, %s4, %s2
  $region1: #{tpu_custom_call.1} parent=0
    #allocation2 [shape = 'u8[8192]{0}', space=vmem, size = 0x2000, scoped, tag = 'input window, operand 0, single buffered']
    #allocation3 [shape = 's32[1]{0}', space=sflag, size = 0x4, scoped, tag = 'scoped memory for tpu_custom_call.1']
    #allocation4 [shape = 's32[1]{0}', space=sflag, size = 0x4, scoped, tag = 'scoped memory for tpu_custom_call.1']
    #allocation5 [shape = 'u8[8192]{0}', space=vmem, size = 0x2000, scoped, tag = 'output window, operand 0, single buffered']
    %6 = vsyncpa [#allocation3], 0
    %7 = vsyncpa [#allocation4], 0
    // Predicated region
    $region2: #{tpu_custom_call.1} parent=1 // pred_check
      _
    $region3: #{tpu_custom_call.1} parent=1 // pred_check_branch
      %9 = sbr.rel (0) target = $region5
    $region4: #{tpu_custom_call.1} parent=1 // pred_region
      %s11 = ssub.s32 256, 256
      %12 = vsyncadd [#allocation3], %s11
      %s14 = sshll.u32 [#allocation2], 4
      %s15 = int_to_ptr.vmem [resolvable:$true] %s14
      %17 = dma.hbm_to_vmem [thread:$0]  %s0, 256, %s15, [#allocation3]
    $region5: #{tpu_custom_call.1} parent=1 // pred_fallthru
      _
    // Predicated region
    $region6: #{tpu_custom_call.1} parent=1 // pred_check
      _
    $region7: #{tpu_custom_call.1} parent=1 // pred_check_branch
      %19 = sbr.rel (0) target = $region9
    $region8: #{tpu_custom_call.1} parent=1 // pred_region
      %20 = dma.done [#allocation3], 256
    $region9: #{tpu_custom_call.1} parent=1 // pred_fallthru
      _
    %v21 = vld [vmem:[#allocation2] sm:$0xff]
    %v22 = vld [vmem:[#allocation2 + $0x8] sm:$0xff]
    %23 = vrot.lane.b32.xlu0 %v21, 3
    %v24 = vpop.permute.xlu0 %23
    %25 = vrot.lane.b32.xlu0 %v22, 3
    %v26 = vpop.permute.xlu0 %25
    %v27 = vlaneseq
    %v28 = vand.u32 %v27, 127
    %vm29 = vcmp.lt.s32.totalorder %v28, 3
    %v30 = vsel %vm29, %v24, %v26
    %v31 = vsel %vm29, %v26, %v24
    %32 = vst [vmem:[#allocation5] sm:$0xff] %v31
    %33 = vst [vmem:[#allocation5 + $0x8] sm:$0xff] %v30
    // Predicated region
    $region10: #{tpu_custom_call.1} parent=1 // pred_check
      _
    $region11: #{tpu_custom_call.1} parent=1 // pred_check_branch
      %35 = sbr.rel (0) target = $region13
    $region12: #{tpu_custom_call.1} parent=1 // pred_region
      %s37 = ssub.s32 256, 256
      %38 = vsyncadd [#allocation4], %s37
      %s40 = sshll.u32 [#allocation5], 4
      %s41 = int_to_ptr.vmem [resolvable:$true] %s40
      %43 = dma.vmem_to_hbm [thread:$0]  %s41, 256, %s1, [#allocation4]
    $region13: #{tpu_custom_call.1} parent=1 // pred_fallthru
      _
    // Predicated region
    $region14: #{tpu_custom_call.1} parent=1 // pred_check
      _
    $region15: #{tpu_custom_call.1} parent=1 // pred_check_branch
      %45 = sbr.rel (0) target = $region17
    $region16: #{tpu_custom_call.1} parent=1 // pred_region
      %46 = dma.done [#allocation4], 256
    $region17: #{tpu_custom_call.1} parent=1 // pred_fallthru
      _
    %47 = vsyncpa [#allocation3], 1
    %48 = vsyncpa [#allocation4], 1

</llo_original>
